<compile_context>
chip_gen: v5e
topology: v5e:2x2
jax: 0.10.0
libtpu: 0.0.40
codegen_flags: <defaults>
</compile_context>

<pallas_src>
import functools

import jax
import jax.numpy as jnp
from jax.experimental import pallas as pl
from jax.experimental.pallas import tpu as pltpu

_LANE = 128
_VMEM_BUDGET = 48 * 1024 * 1024  # keep well under v7x's 64 MiB physical VMEM


def _round_up(x, m):
    return ((x + m - 1) // m) * m


def _pad2d(a, rows, cols):
    return jnp.pad(a, ((0, rows - a.shape[0]), (0, cols - a.shape[1])))


def _vmem_estimate(tile_b, in_p, h1_p, h2_p, out_p):
    w_bytes = 2 * (in_p * h1_p + h1_p * h2_p + h2_p * out_p)   # bf16, resident
    b_bytes = 4 * (h1_p + h2_p + out_p)                        # f32 biases, resident
    x_bytes = 2 * 2 * tile_b * in_p                            # double-buffered bf16 x tiles
    o_bytes = 2 * 4 * tile_b * out_p                           # double-buffered f32 out tiles
    inter = 4 * tile_b * (h1_p + h2_p)                         # f32 h1/h2 temporaries
    return w_bytes + b_bytes + x_bytes + o_bytes + inter


def _mlp_kernel(x_ref, w1_ref, b1_ref, w2_ref, b2_ref, w3_ref, b3_ref, o_ref):
    # x_ref/weights are bf16; biases f32; accumulate in f32 on the MXU.
    h1 = jnp.tanh(
        jnp.dot(x_ref[...], w1_ref[...], preferred_element_type=jnp.float32)
        + b1_ref[...]
    )
    h2 = jnp.tanh(
        jnp.dot(h1.astype(jnp.bfloat16), w2_ref[...],
                preferred_element_type=jnp.float32)
        + b2_ref[...]
    )
    o_ref[...] = (
        jnp.dot(h2.astype(jnp.bfloat16), w3_ref[...],
                preferred_element_type=jnp.float32)
        + b3_ref[...]
    ).astype(o_ref.dtype)


@functools.partial(jax.jit, static_argnames=("tile_b",))
def multi_layer_policy(x, w1, b1, w2, b2, w3, b3, *, tile_b=None):
    """Pallas forward pass of MultiLayerPolicy.

    x  : [B, input_dim]
    w1 : [input_dim, hidden_dim]     b1: [1, hidden_dim]
    w2 : [hidden_dim, hidden_dim2]   b2: [1, hidden_dim2]
    w3 : [hidden_dim2, output_dim]   b3: [1, output_dim]
    returns [B, output_dim] float32   (y = x @ W + b, matches torch.nn.Linear)
    """
    x = jnp.asarray(x, jnp.float32)
    B, in_dim = x.shape
    h1_dim, h2_dim, out_dim = w1.shape[1], w2.shape[1], w3.shape[1]

    # Lane-pad every feature dim to a multiple of 128.
    in_p = _round_up(in_dim, _LANE)
    h1_p = _round_up(h1_dim, _LANE)
    h2_p = _round_up(h2_dim, _LANE)
    out_p = _round_up(out_dim, _LANE)

    # Batch tile: as large as fits the VMEM budget (cap 512 rows), min 128 for MXU M.
    if tile_b is None:
        tile_b = min(512, _round_up(B, _LANE))
        while tile_b > _LANE and _vmem_estimate(tile_b, in_p, h1_p, h2_p, out_p) > _VMEM_BUDGET:
            tile_b //= 2
    B_p = _round_up(B, tile_b)
    grid = (B_p // tile_b,)

    # Zero-pad and cast matmul operands to bf16; biases stay f32.
    x_p = _pad2d(x, B_p, in_p).astype(jnp.bfloat16)
    w1_p = _pad2d(jnp.asarray(w1, jnp.float32), in_p, h1_p).astype(jnp.bfloat16)
    w2_p = _pad2d(jnp.asarray(w2, jnp.float32), h1_p, h2_p).astype(jnp.bfloat16)
    w3_p = _pad2d(jnp.asarray(w3, jnp.float32), h2_p, out_p).astype(jnp.bfloat16)
    b1_p = _pad2d(jnp.asarray(b1, jnp.float32).reshape(1, -1), 1, h1_p)
    b2_p = _pad2d(jnp.asarray(b2, jnp.float32).reshape(1, -1), 1, h2_p)
    b3_p = _pad2d(jnp.asarray(b3, jnp.float32).reshape(1, -1), 1, out_p)

    vmem_limit = int(min(64 * 1024 * 1024,
                         max(4 * 1024 * 1024,
                             2 * _vmem_estimate(tile_b, in_p, h1_p, h2_p, out_p))))

    cost = pl.CostEstimate(
        flops=2 * B_p * (in_p * h1_p + h1_p * h2_p + h2_p * out_p),
        transcendentals=B_p * (h1_p + h2_p),
        bytes_accessed=(x_p.size * 2 + w1_p.size * 2 + w2_p.size * 2 + w3_p.size * 2
                        + (b1_p.size + b2_p.size + b3_p.size) * 4
                        + B_p * out_p * 4),
    )

    out_padded = pl.pallas_call(
        _mlp_kernel,
        out_shape=jax.ShapeDtypeStruct((B_p, out_p), jnp.float32),
        grid=grid,
        in_specs=[
            pl.BlockSpec((tile_b, in_p), lambda i: (i, 0)),   # x tile, pipelined
            pl.BlockSpec((in_p, h1_p), lambda i: (0, 0)),     # resident weights
            pl.BlockSpec((1, h1_p), lambda i: (0, 0)),        # resident bias
            pl.BlockSpec((h1_p, h2_p), lambda i: (0, 0)),
            pl.BlockSpec((1, h2_p), lambda i: (0, 0)),
            pl.BlockSpec((h2_p, out_p), lambda i: (0, 0)),
            pl.BlockSpec((1, out_p), lambda i: (0, 0)),
        ],
        out_specs=pl.BlockSpec((tile_b, out_p), lambda i: (i, 0)),
        compiler_params=pltpu.CompilerParams(
            dimension_semantics=("parallel",),
            vmem_limit_bytes=vmem_limit,
        ),
        cost_estimate=cost,
    )(x_p, w1_p, b1_p, w2_p, b2_p, w3_p, b3_p)

    return out_padded[:B, :out_dim]


def init_linear_params(key, in_dim, out_dim):
    """Deterministic init mimicking torch.nn.Linear default (uniform +/- 1/sqrt(in)).

    Stored as [in, out] so the kernel computes x @ W (== torch's x @ W^T)."""
    kw, kb = jax.random.split(key)
    bound = 1.0 / jnp.sqrt(jnp.float32(in_dim))
    w = jax.random.uniform(kw, (in_dim, out_dim), jnp.float32, -bound, bound)
    b = jax.random.uniform(kb, (1, out_dim), jnp.float32, -bound, bound)
    return w, b


if __name__ == "__main__":
    # Small shapes consistent with the module's forward: x is [batch, input_dim].
    # NOTE: at sizes this tiny the pallas_call overhead dominates; the kernel is
    # sized/tiled for large batches (the intended production regime).
    batch, input_dim, hidden_dim, hidden_dim2, output_dim = 8, 16, 32, 32, 4

    root = jax.random.PRNGKey(0)
    kx, k1, k2, k3 = jax.random.split(root, 4)

    x = jax.random.normal(kx, (batch, input_dim), jnp.float32)
    w1, b1 = init_linear_params(k1, input_dim, hidden_dim)
    w2, b2 = init_linear_params(k2, hidden_dim, hidden_dim2)
    w3, b3 = init_linear_params(k3, hidden_dim2, output_dim)

    out = multi_layer_policy(x, w1, b1, w2, b2, w3, b3)
    out = jax.block_until_ready(out)
    assert out.shape == (batch, output_dim)

    # Reference 1: emulate the kernel's bf16-operand / f32-accumulate matmuls (tight tol).
    bf = jnp.bfloat16
    r = jnp.tanh(jnp.dot(x.astype(bf), w1.astype(bf),
                         preferred_element_type=jnp.float32) + b1)
    r = jnp.tanh(jnp.dot(r.astype(bf), w2.astype(bf),
                         preferred_element_type=jnp.float32) + b2)
    ref_bf16 = jnp.dot(r.astype(bf), w3.astype(bf),
                       preferred_element_type=jnp.float32) + b3
    assert jnp.allclose(out, ref_bf16, atol=1e-5, rtol=1e-5), "mismatch vs bf16 reference"

    # Reference 2: full f32 reference (loose tol covers bf16 operand rounding).
    ref_f32 = jnp.tanh(x @ w1 + b1)
    ref_f32 = jnp.tanh(ref_f32 @ w2 + b2)
    ref_f32 = ref_f32 @ w3 + b3
    assert jnp.allclose(out, ref_f32, atol=5e-2, rtol=5e-2), "mismatch vs f32 reference"

    print("KERNEL_OK")
</pallas_src>

<mosaic_0001>
module attributes {stable_mosaic.version = 11 : i64} {
  func.func @_mlp_kernel(%arg0: i32, %arg1: memref<128x128xbf16, #tpu.memory_space<vmem>>, %arg2: memref<128x128xbf16, #tpu.memory_space<vmem>>, %arg3: memref<1x128xf32, #tpu.memory_space<vmem>>, %arg4: memref<128x128xbf16, #tpu.memory_space<vmem>>, %arg5: memref<1x128xf32, #tpu.memory_space<vmem>>, %arg6: memref<128x128xbf16, #tpu.memory_space<vmem>>, %arg7: memref<1x128xf32, #tpu.memory_space<vmem>>, %arg8: memref<128x128xf32, #tpu.memory_space<vmem>>) attributes {dimension_semantics = [#tpu.dimension_semantics<parallel>], iteration_bounds = array<i64: 1>, scalar_prefetch = 0 : i64, scratch_operands = 0 : i64, tpu.core_type = #tpu.core_type<tc>, window_params = [{transform_indices = @transform_0, window_bounds = array<i64: 128, 128>}, {pipeline_mode = #tpu.pipeline_mode<synchronous>, transform_indices = @transform_1, window_bounds = array<i64: 128, 128>}, {pipeline_mode = #tpu.pipeline_mode<synchronous>, transform_indices = @transform_2, window_bounds = array<i64: 1, 128>}, {pipeline_mode = #tpu.pipeline_mode<synchronous>, transform_indices = @transform_3, window_bounds = array<i64: 128, 128>}, {pipeline_mode = #tpu.pipeline_mode<synchronous>, transform_indices = @transform_4, window_bounds = array<i64: 1, 128>}, {pipeline_mode = #tpu.pipeline_mode<synchronous>, transform_indices = @transform_5, window_bounds = array<i64: 128, 128>}, {pipeline_mode = #tpu.pipeline_mode<synchronous>, transform_indices = @transform_6, window_bounds = array<i64: 1, 128>}, {transform_indices = @transform_7, window_bounds = array<i64: 128, 128>}]} {
    %c0 = arith.constant 0 : index
    %c0_0 = arith.constant 0 : index
    %0 = vector.load %arg1[%c0, %c0_0] : memref<128x128xbf16, #tpu.memory_space<vmem>>, vector<128x128xbf16>
    %c0_1 = arith.constant 0 : index
    %c0_2 = arith.constant 0 : index
    %1 = vector.load %arg2[%c0_1, %c0_2] : memref<128x128xbf16, #tpu.memory_space<vmem>>, vector<128x128xbf16>
    %cst = arith.constant dense<0.000000e+00> : vector<128x128xf32>
    %2 = tpu.matmul %0, %1, %cst {dimension_numbers = #tpu.dot_dimension_numbers<[1], [0], [0], [1], [0, 0, 1, 1], [], []>} : vector<128x128xbf16>, vector<128x128xbf16>, vector<128x128xf32> -> vector<128x128xf32>
    %c0_3 = arith.constant 0 : index
    %c0_4 = arith.constant 0 : index
    %3 = vector.load %arg3[%c0_3, %c0_4] : memref<1x128xf32, #tpu.memory_space<vmem>>, vector<1x128xf32>
    %4 = vector.broadcast %3 : vector<1x128xf32> to vector<128x128xf32>
    %5 = arith.addf %2, %4 : vector<128x128xf32>
    %6 = math.tanh %5 : vector<128x128xf32>
    %7 = arith.truncf %6 : vector<128x128xf32> to vector<128x128xbf16>
    %c0_5 = arith.constant 0 : index
    %c0_6 = arith.constant 0 : index
    %8 = vector.load %arg4[%c0_5, %c0_6] : memref<128x128xbf16, #tpu.memory_space<vmem>>, vector<128x128xbf16>
    %cst_7 = arith.constant dense<0.000000e+00> : vector<128x128xf32>
    %9 = tpu.matmul %7, %8, %cst_7 {dimension_numbers = #tpu.dot_dimension_numbers<[1], [0], [0], [1], [0, 0, 1, 1], [], []>} : vector<128x128xbf16>, vector<128x128xbf16>, vector<128x128xf32> -> vector<128x128xf32>
    %c0_8 = arith.constant 0 : index
    %c0_9 = arith.constant 0 : index
    %10 = vector.load %arg5[%c0_8, %c0_9] : memref<1x128xf32, #tpu.memory_space<vmem>>, vector<1x128xf32>
    %11 = vector.broadcast %10 : vector<1x128xf32> to vector<128x128xf32>
    %12 = arith.addf %9, %11 : vector<128x128xf32>
    %13 = math.tanh %12 : vector<128x128xf32>
    %14 = arith.truncf %13 : vector<128x128xf32> to vector<128x128xbf16>
    %c0_10 = arith.constant 0 : index
    %c0_11 = arith.constant 0 : index
    %15 = vector.load %arg6[%c0_10, %c0_11] : memref<128x128xbf16, #tpu.memory_space<vmem>>, vector<128x128xbf16>
    %cst_12 = arith.constant dense<0.000000e+00> : vector<128x128xf32>
    %16 = tpu.matmul %14, %15, %cst_12 {dimension_numbers = #tpu.dot_dimension_numbers<[1], [0], [0], [1], [0, 0, 1, 1], [], []>} : vector<128x128xbf16>, vector<128x128xbf16>, vector<128x128xf32> -> vector<128x128xf32>
    %c0_13 = arith.constant 0 : index
    %c0_14 = arith.constant 0 : index
    %17 = vector.load %arg7[%c0_13, %c0_14] : memref<1x128xf32, #tpu.memory_space<vmem>>, vector<1x128xf32>
    %18 = vector.broadcast %17 : vector<1x128xf32> to vector<128x128xf32>
    %19 = arith.addf %16, %18 : vector<128x128xf32>
    %c0_15 = arith.constant 0 : index
    %c0_16 = arith.constant 0 : index
    %20 = vector.load %arg8[%c0_15, %c0_16] : memref<128x128xf32, #tpu.memory_space<vmem>>, vector<128x128xf32>
    tpu.vector_store %arg8[%c0_15, %c0_16], %19 {strides = array<i32>} : memref<128x128xf32, #tpu.memory_space<vmem>>, vector<128x128xf32>,
    return
  }
  func.func @transform_0(%arg0: i32) -> (i32, i32) {
    %c0_i32 = arith.constant 0 : i32
    %c0_i32_0 = arith.constant 0 : i32
    return %arg0, %c0_i32 : i32, i32
  }
  func.func @transform_1(%arg0: i32) -> (i32, i32) {
    %c0_i32 = arith.constant 0 : i32
    %c0_i32_0 = arith.constant 0 : i32
    %c0_i32_1 = arith.constant 0 : i32
    return %c0_i32, %c0_i32_0 : i32, i32
  }
  func.func @transform_2(%arg0: i32) -> (i32, i32) {
    %c0_i32 = arith.constant 0 : i32
    %c0_i32_0 = arith.constant 0 : i32
    %c0_i32_1 = arith.constant 0 : i32
    return %c0_i32, %c0_i32_0 : i32, i32
  }
  func.func @transform_3(%arg0: i32) -> (i32, i32) {
    %c0_i32 = arith.constant 0 : i32
    %c0_i32_0 = arith.constant 0 : i32
    %c0_i32_1 = arith.constant 0 : i32
    return %c0_i32, %c0_i32_0 : i32, i32
  }
  func.func @transform_4(%arg0: i32) -> (i32, i32) {
    %c0_i32 = arith.constant 0 : i32
    %c0_i32_0 = arith.constant 0 : i32
    %c0_i32_1 = arith.constant 0 : i32
    return %c0_i32, %c0_i32_0 : i32, i32
  }
  func.func @transform_5(%arg0: i32) -> (i32, i32) {
    %c0_i32 = arith.constant 0 : i32
    %c0_i32_0 = arith.constant 0 : i32
    %c0_i32_1 = arith.constant 0 : i32
    return %c0_i32, %c0_i32_0 : i32, i32
  }
  func.func @transform_6(%arg0: i32) -> (i32, i32) {
    %c0_i32 = arith.constant 0 : i32
    %c0_i32_0 = arith.constant 0 : i32
    %c0_i32_1 = arith.constant 0 : i32
    return %c0_i32, %c0_i32_0 : i32, i32
  }
  func.func @transform_7(%arg0: i32) -> (i32, i32) {
    %c0_i32 = arith.constant 0 : i32
    %c0_i32_0 = arith.constant 0 : i32
    return %arg0, %c0_i32 : i32, i32
  }
}

</mosaic_0001>

<llo_original>
// kernel: multi_layer_policy.1
$region0: #{multi_layer_policy.1}
  #allocation0 [shape = 'u32[]', space=smem, size = 0x4, offset = 0x4, fixed_abs, tag = 'smem constant byte address 0x4 - core index']
  #allocation1 [shape = 'u32[72,128]{1,0:T(1,128)}', space=vmem, size = 0x9000, scoped, tag = 'internal scratch']
  %s0 = inlined_call_operand.vmem [shape: bf16[128,128], index: 0, kind: input, shape index: {}]
  %s1 = inlined_call_operand.vmem [shape: bf16[128,128], index: 1, kind: input, shape index: {}]
  %s2 = inlined_call_operand.vmem [shape: f32[1,128], index: 2, kind: input, shape index: {}]
  %s3 = inlined_call_operand.vmem [shape: bf16[128,128], index: 3, kind: input, shape index: {}]
  %s4 = inlined_call_operand.vmem [shape: f32[1,128], index: 4, kind: input, shape index: {}]
  %s5 = inlined_call_operand.vmem [shape: bf16[128,128], index: 5, kind: input, shape index: {}]
  %s6 = inlined_call_operand.vmem [shape: f32[1,128], index: 6, kind: input, shape index: {}]
  %s7 = inlined_call_operand.vmem [shape: f32[128,128], index: 7, kind: output, shape index: {}]
  %s8 = sld [smem:[#allocation0]]
  $region38: #{multi_layer_policy.1} parent=0
    _
  %s10 = ssub.s32 1, %s8
  %s11 = scalar_select 0, %s10, %s8
  // Predicated region
  $region2: #{multi_layer_policy.1} parent=0 // pred_check
    _
  $region3: #{multi_layer_policy.1} parent=0 // pred_check_branch
    %13 = sbr.rel (0) target = $region5
  $region4: #{multi_layer_policy.1} parent=0 // pred_region
    _
  $region5: #{multi_layer_policy.1} parent=0 // pred_fallthru
    _
  // Predicated region
  $region6: #{multi_layer_policy.1} parent=0 // pred_check
    _
  $region7: #{multi_layer_policy.1} parent=0 // pred_check_branch
    %15 = sbr.rel (0) target = $region9
  $region8: #{multi_layer_policy.1} parent=0 // pred_region
    _
  $region9: #{multi_layer_policy.1} parent=0 // pred_fallthru
    _
  // Predicated region
  $region10: #{multi_layer_policy.1} parent=0 // pred_check
    _
  $region11: #{multi_layer_policy.1} parent=0 // pred_check_branch
    %17 = sbr.rel (0) target = $region13
  $region12: #{multi_layer_policy.1} parent=0 // pred_region
    _
  $region13: #{multi_layer_policy.1} parent=0 // pred_fallthru
    _
  // Predicated region
  $region14: #{multi_layer_policy.1} parent=0 // pred_check
    _
  $region15: #{multi_layer_policy.1} parent=0 // pred_check_branch
    %19 = sbr.rel (0) target = $region17
  $region16: #{multi_layer_policy.1} parent=0 // pred_region
    _
  $region17: #{multi_layer_policy.1} parent=0 // pred_fallthru
    _
  // Predicated region
  $region18: #{multi_layer_policy.1} parent=0 // pred_check
    _
  $region19: #{multi_layer_policy.1} parent=0 // pred_check_branch
    %21 = sbr.rel (0) target = $region21
  $region20: #{multi_layer_policy.1} parent=0 // pred_region
    _
  $region21: #{multi_layer_policy.1} parent=0 // pred_fallthru
    _
  // Predicated region
  $region22: #{multi_layer_policy.1} parent=0 // pred_check
    _
  $region23: #{multi_layer_policy.1} parent=0 // pred_check_branch
    %23 = sbr.rel (0) target = $region25
  $region24: #{multi_layer_policy.1} parent=0 // pred_region
    _
  $region25: #{multi_layer_policy.1} parent=0 // pred_fallthru
    _
  // Predicated region
  $region26: #{multi_layer_policy.1} parent=0 // pred_check
    _
  $region27: #{multi_layer_policy.1} parent=0 // pred_check_branch
    %25 = sbr.rel (0) target = $region29
  $region28: #{multi_layer_policy.1} parent=0 // pred_region
    _
  $region29: #{multi_layer_policy.1} parent=0 // pred_fallthru
    _
  %v26 = vld [vmem:[%s0] sm:$0xf]
  %v27 = vld [vmem:[%s0 + $0x4] sm:$0xf]
  %v28 = vld [vmem:[%s0 + $0x8] sm:$0xf]
  %v29 = vld [vmem:[%s0 + $0xc] sm:$0xf]
  %v30 = vld [vmem:[%s0 + $0x10] sm:$0xf]
  %v31 = vld [vmem:[%s0 + $0x14] sm:$0xf]
  %v32 = vld [vmem:[%s0 + $0x18] sm:$0xf]
  %v33 = vld [vmem:[%s0 + $0x1c] sm:$0xf]
  %v34 = vld [vmem:[%s0 + $0x20] sm:$0xf]
  %v35 = vld [vmem:[%s0 + $0x24] sm:$0xf]
  %v36 = vld [vmem:[%s0 + $0x28] sm:$0xf]
  %v37 = vld [vmem:[%s0 + $0x2c] sm:$0xf]
  %v38 = vld [vmem:[%s0 + $0x30] sm:$0xf]
  %v39 = vld [vmem:[%s0 + $0x34] sm:$0xf]
  %v40 = vld [vmem:[%s0 + $0x38] sm:$0xf]
  %v41 = vld [vmem:[%s0 + $0x3c] sm:$0xf]
  %v42 = vld [vmem:[%s1] sm:$0xf]
  %v43 = vld [vmem:[%s1 + $0x4] sm:$0xf]
  %v44 = vld [vmem:[%s1 + $0x8] sm:$0xf]
  %v45 = vld [vmem:[%s1 + $0xc] sm:$0xf]
  %v46 = vld [vmem:[%s1 + $0x10] sm:$0xf]
  %v47 = vld [vmem:[%s1 + $0x14] sm:$0xf]
  %v48 = vld [vmem:[%s1 + $0x18] sm:$0xf]
  %v49 = vld [vmem:[%s1 + $0x1c] sm:$0xf]
  %v50 = vld [vmem:[%s1 + $0x20] sm:$0xf]
  %v51 = vld [vmem:[%s1 + $0x24] sm:$0xf]
  %v52 = vld [vmem:[%s1 + $0x28] sm:$0xf]
  %v53 = vld [vmem:[%s1 + $0x2c] sm:$0xf]
  %v54 = vld [vmem:[%s1 + $0x30] sm:$0xf]
  %v55 = vld [vmem:[%s1 + $0x34] sm:$0xf]
  %v56 = vld [vmem:[%s1 + $0x38] sm:$0xf]
  %v57 = vld [vmem:[%s1 + $0x3c] sm:$0xf]
  %v58 = vld [vmem:[%s2] sm:$0x1]
  %v60 = vperm.slane %v58, 0
  %v78 = vunpack.c.l.b16 %v26
  %v79 = vunpack.c.l.b16 %v27
  %v80 = vunpack.c.l.b16 %v28
  %v81 = vunpack.c.l.b16 %v29
  %v82 = vunpack.c.l.b16 %v30
  %v83 = vunpack.c.l.b16 %v31
  %v84 = vunpack.c.l.b16 %v32
  %v85 = vunpack.c.l.b16 %v33
  %v86 = vunpack.c.l.b16 %v34
  %v87 = vunpack.c.l.b16 %v35
  %v88 = vunpack.c.l.b16 %v36
  %v89 = vunpack.c.l.b16 %v37
  %v90 = vunpack.c.l.b16 %v38
  %v91 = vunpack.c.l.b16 %v39
  %v92 = vunpack.c.l.b16 %v40
  %v93 = vunpack.c.l.b16 %v41
  %v94 = vpack.c.b16 %v79, %v78
  %v95 = vpack.c.b16 %v81, %v80
  %v96 = vpack.c.b16 %v83, %v82
  %v97 = vpack.c.b16 %v85, %v84
  %v98 = vpack.c.b16 %v87, %v86
  %v99 = vpack.c.b16 %v89, %v88
  %v100 = vpack.c.b16 %v91, %v90
  %v101 = vpack.c.b16 %v93, %v92
  %v126 = vunpack.c.l.b16 %v42
  %v127 = vunpack.c.l.b16 %v43
  %v128 = vunpack.c.l.b16 %v44
  %v129 = vunpack.c.l.b16 %v45
  %v130 = vunpack.c.l.b16 %v46
  %v131 = vunpack.c.l.b16 %v47
  %v132 = vunpack.c.l.b16 %v48
  %v133 = vunpack.c.l.b16 %v49
  %v134 = vunpack.c.l.b16 %v50
  %v135 = vunpack.c.l.b16 %v51
  %v136 = vunpack.c.l.b16 %v52
  %v137 = vunpack.c.l.b16 %v53
  %v138 = vunpack.c.l.b16 %v54
  %v139 = vunpack.c.l.b16 %v55
  %v140 = vunpack.c.l.b16 %v56
  %v141 = vunpack.c.l.b16 %v57
  %v142 = vpack.c.b16 %v127, %v126
  %v143 = vpack.c.b16 %v129, %v128
  %v144 = vpack.c.b16 %v131, %v130
  %v145 = vpack.c.b16 %v133, %v132
  %v146 = vpack.c.b16 %v135, %v134
  %v147 = vpack.c.b16 %v137, %v136
  %v148 = vpack.c.b16 %v139, %v138
  %v149 = vpack.c.b16 %v141, %v140
  %158 = vmatpush.bf16.msra.mxu0 %v149
  %159 = vmatpush.bf16.msra.mxu0 %v148
  %160 = vmatpush.bf16.msra.mxu0 %v147
  %161 = vmatpush.bf16.msra.mxu0 %v146
  %162 = vmatpush.bf16.msra.mxu0 %v145
  %163 = vmatpush.bf16.msra.mxu0 %v144
  %164 = vmatpush.bf16.msra.mxu0 %v143
  %165 = vmatpush.bf16.msra.mxu0 %v142
  %166 = vmatmul.bf16.gmra.mxu0 %v94
  %v167 = vpop.f32.mrf.mxu0
  %v168 = vadd.f32 %v60, %v167
  %v169 = vpop.f32.mrf.mxu0
  %v170 = vadd.f32 %v60, %v169
  %171 = vmatmul.bf16.gmra.mxu0 %v95
  %v172 = vpop.f32.mrf.mxu0
  %v173 = vadd.f32 %v60, %v172
  %v174 = vpop.f32.mrf.mxu0
  %v175 = vadd.f32 %v60, %v174
  %176 = vmatmul.bf16.gmra.mxu0 %v96
  %v177 = vpop.f32.mrf.mxu0
  %v178 = vadd.f32 %v60, %v177
  %v179 = vpop.f32.mrf.mxu0
  %v180 = vadd.f32 %v60, %v179
  %181 = vmatmul.bf16.gmra.mxu0 %v97
  %v182 = vpop.f32.mrf.mxu0
  %v183 = vadd.f32 %v60, %v182
  %v184 = vpop.f32.mrf.mxu0
  %v185 = vadd.f32 %v60, %v184
  %186 = vmatmul.bf16.gmra.mxu0 %v98
  %v187 = vpop.f32.mrf.mxu0
  %v188 = vadd.f32 %v60, %v187
  %v189 = vpop.f32.mrf.mxu0
  %v190 = vadd.f32 %v60, %v189
  %191 = vmatmul.bf16.gmra.mxu0 %v99
  %v192 = vpop.f32.mrf.mxu0
  %v193 = vadd.f32 %v60, %v192
  %v194 = vpop.f32.mrf.mxu0
  %v195 = vadd.f32 %v60, %v194
  %196 = vmatmul.bf16.gmra.mxu0 %v100
  %v197 = vpop.f32.mrf.mxu0
  %v198 = vadd.f32 %v60, %v197
  %v199 = vpop.f32.mrf.mxu0
  %v200 = vadd.f32 %v60, %v199
  %201 = vmatmul.bf16.gmra.mxu0 %v101
  %v202 = vpop.f32.mrf.mxu0
  %v203 = vadd.f32 %v60, %v202
  %v204 = vpop.f32.mrf.mxu0
  %v205 = vadd.f32 %v60, %v204
  %206 = vdwg.mxu0
  %v207 = vtanh.pop %v168
  %v208 = vtanh.pop %v170
  %v209 = vtanh.pop %v173
  %v210 = vtanh.pop %v175
  %v211 = vtanh.pop %v178
  %v212 = vtanh.pop %v180
  %v213 = vtanh.pop %v183
  %v214 = vtanh.pop %v185
  %v215 = vtanh.pop %v188
  %v216 = vtanh.pop %v190
  %v217 = vtanh.pop %v193
  %v218 = vtanh.pop %v195
  %v219 = vtanh.pop %v198
  %v220 = vtanh.pop %v200
  %v221 = vtanh.pop %v203
  %v222 = vtanh.pop %v205
  %v223 = vpack.c.bf16 %v208, %v207
  %v224 = vpack.c.bf16 %v210, %v209
  %v225 = vpack.c.bf16 %v212, %v211
  %v226 = vpack.c.bf16 %v214, %v213
  %v227 = vpack.c.bf16 %v216, %v215
  %v228 = vpack.c.bf16 %v218, %v217
  %v229 = vpack.c.bf16 %v220, %v219
  %v230 = vpack.c.bf16 %v222, %v221
  %v231 = vld [vmem:[%s3] sm:$0xf]
  %v232 = vld [vmem:[%s3 + $0x4] sm:$0xf]
  %v233 = vld [vmem:[%s3 + $0x8] sm:$0xf]
  %v234 = vld [vmem:[%s3 + $0xc] sm:$0xf]
  %v235 = vld [vmem:[%s3 + $0x10] sm:$0xf]
  %v236 = vld [vmem:[%s3 + $0x14] sm:$0xf]
  %v237 = vld [vmem:[%s3 + $0x18] sm:$0xf]
  %v238 = vld [vmem:[%s3 + $0x1c] sm:$0xf]
  %v239 = vld [vmem:[%s3 + $0x20] sm:$0xf]
  %v240 = vld [vmem:[%s3 + $0x24] sm:$0xf]
  %v241 = vld [vmem:[%s3 + $0x28] sm:$0xf]
  %v242 = vld [vmem:[%s3 + $0x2c] sm:$0xf]
  %v243 = vld [vmem:[%s3 + $0x30] sm:$0xf]
  %v244 = vld [vmem:[%s3 + $0x34] sm:$0xf]
  %v245 = vld [vmem:[%s3 + $0x38] sm:$0xf]
  %v246 = vld [vmem:[%s3 + $0x3c] sm:$0xf]
  %v247 = vld [vmem:[%s4] sm:$0x1]
  %v249 = vperm.slane %v247, 0
  %v267 = vunpack.c.l.b16 %v231
  %v268 = vunpack.c.l.b16 %v232
  %v269 = vunpack.c.l.b16 %v233
  %v270 = vunpack.c.l.b16 %v234
  %v271 = vunpack.c.l.b16 %v235
  %v272 = vunpack.c.l.b16 %v236
  %v273 = vunpack.c.l.b16 %v237
  %v274 = vunpack.c.l.b16 %v238
  %v275 = vunpack.c.l.b16 %v239
  %v276 = vunpack.c.l.b16 %v240
  %v277 = vunpack.c.l.b16 %v241
  %v278 = vunpack.c.l.b16 %v242
  %v279 = vunpack.c.l.b16 %v243
  %v280 = vunpack.c.l.b16 %v244
  %v281 = vunpack.c.l.b16 %v245
  %v282 = vunpack.c.l.b16 %v246
  %v283 = vpack.c.b16 %v268, %v267
  %v284 = vpack.c.b16 %v270, %v269
  %v285 = vpack.c.b16 %v272, %v271
  %v286 = vpack.c.b16 %v274, %v273
  %v287 = vpack.c.b16 %v276, %v275
  %v288 = vpack.c.b16 %v278, %v277
  %v289 = vpack.c.b16 %v280, %v279
  %v290 = vpack.c.b16 %v282, %v281
  %299 = vmatpush.bf16.msra.mxu0 %v290
  %300 = vmatpush.bf16.msra.mxu0 %v289
  %301 = vmatpush.bf16.msra.mxu0 %v288
  %302 = vmatpush.bf16.msra.mxu0 %v287
  %303 = vmatpush.bf16.msra.mxu0 %v286
  %304 = vmatpush.bf16.msra.mxu0 %v285
  %305 = vmatpush.bf16.msra.mxu0 %v284
  %306 = vmatpush.bf16.msra.mxu0 %v283
  %307 = vmatmul.bf16.gmra.mxu0 %v223
  %v308 = vpop.f32.mrf.mxu0
  %v309 = vadd.f32 %v249, %v308
  %v310 = vpop.f32.mrf.mxu0
  %v311 = vadd.f32 %v249, %v310
  %312 = vmatmul.bf16.gmra.mxu0 %v224
  %v313 = vpop.f32.mrf.mxu0
  %v314 = vadd.f32 %v249, %v313
  %v315 = vpop.f32.mrf.mxu0
  %v316 = vadd.f32 %v249, %v315
  %317 = vmatmul.bf16.gmra.mxu0 %v225
  %v318 = vpop.f32.mrf.mxu0
  %v319 = vadd.f32 %v249, %v318
  %v320 = vpop.f32.mrf.mxu0
  %v321 = vadd.f32 %v249, %v320
  %322 = vmatmul.bf16.gmra.mxu0 %v226
  %v323 = vpop.f32.mrf.mxu0
  %v324 = vadd.f32 %v249, %v323
  %v325 = vpop.f32.mrf.mxu0
  %v326 = vadd.f32 %v249, %v325
  %327 = vmatmul.bf16.gmra.mxu0 %v227
  %v328 = vpop.f32.mrf.mxu0
  %v329 = vadd.f32 %v249, %v328
  %v330 = vpop.f32.mrf.mxu0
  %v331 = vadd.f32 %v249, %v330
  %332 = vmatmul.bf16.gmra.mxu0 %v228
  %v333 = vpop.f32.mrf.mxu0
  %v334 = vadd.f32 %v249, %v333
  %v335 = vpop.f32.mrf.mxu0
  %v336 = vadd.f32 %v249, %v335
  %337 = vmatmul.bf16.gmra.mxu0 %v229
  %v338 = vpop.f32.mrf.mxu0
  %v339 = vadd.f32 %v249, %v338
  %v340 = vpop.f32.mrf.mxu0
  %v341 = vadd.f32 %v249, %v340
  %342 = vmatmul.bf16.gmra.mxu0 %v230
  %v343 = vpop.f32.mrf.mxu0
  %v344 = vadd.f32 %v249, %v343
  %v345 = vpop.f32.mrf.mxu0
  %v346 = vadd.f32 %v249, %v345
  %347 = vdwg.mxu0
  %v348 = vtanh.pop %v309
  %v349 = vtanh.pop %v311
  %v350 = vtanh.pop %v314
  %v351 = vtanh.pop %v316
  %v352 = vtanh.pop %v319
  %v353 = vtanh.pop %v321
  %v354 = vtanh.pop %v324
  %v355 = vtanh.pop %v326
  %v356 = vtanh.pop %v329
  %v357 = vtanh.pop %v331
  %v358 = vtanh.pop %v334
  %v359 = vtanh.pop %v336
  %v360 = vtanh.pop %v339
  %v361 = vtanh.pop %v341
  %v362 = vtanh.pop %v344
  %v363 = vtanh.pop %v346
  %v364 = vpack.c.bf16 %v349, %v348
  %v365 = vpack.c.bf16 %v351, %v350
  %v366 = vpack.c.bf16 %v353, %v352
  %v367 = vpack.c.bf16 %v355, %v354
  %v368 = vpack.c.bf16 %v357, %v356
  %v369 = vpack.c.bf16 %v359, %v358
  %v370 = vpack.c.bf16 %v361, %v360
  %v371 = vpack.c.bf16 %v363, %v362
  %v372 = vld [vmem:[%s5] sm:$0xf]
  %v373 = vld [vmem:[%s5 + $0x4] sm:$0xf]
  %v374 = vld [vmem:[%s5 + $0x8] sm:$0xf]
  %v375 = vld [vmem:[%s5 + $0xc] sm:$0xf]
  %v376 = vld [vmem:[%s5 + $0x10] sm:$0xf]
  %v377 = vld [vmem:[%s5 + $0x14] sm:$0xf]
  %v378 = vld [vmem:[%s5 + $0x18] sm:$0xf]
  %v379 = vld [vmem:[%s5 + $0x1c] sm:$0xf]
  %v380 = vld [vmem:[%s5 + $0x20] sm:$0xf]
  %v381 = vld [vmem:[%s5 + $0x24] sm:$0xf]
  %v382 = vld [vmem:[%s5 + $0x28] sm:$0xf]
  %v383 = vld [vmem:[%s5 + $0x2c] sm:$0xf]
  %v384 = vld [vmem:[%s5 + $0x30] sm:$0xf]
  %v385 = vld [vmem:[%s5 + $0x34] sm:$0xf]
  %v386 = vld [vmem:[%s5 + $0x38] sm:$0xf]
  %v387 = vld [vmem:[%s5 + $0x3c] sm:$0xf]
  %v388 = vld [vmem:[%s6] sm:$0x1]
  %v390 = vperm.slane %v388, 0
  %v408 = vunpack.c.l.b16 %v372
  %v409 = vunpack.c.l.b16 %v373
  %v410 = vunpack.c.l.b16 %v374
  %v411 = vunpack.c.l.b16 %v375
  %v412 = vunpack.c.l.b16 %v376
  %v413 = vunpack.c.l.b16 %v377
  %v414 = vunpack.c.l.b16 %v378
  %v415 = vunpack.c.l.b16 %v379
  %v416 = vunpack.c.l.b16 %v380
  %v417 = vunpack.c.l.b16 %v381
  %v418 = vunpack.c.l.b16 %v382
  %v419 = vunpack.c.l.b16 %v383
  %v420 = vunpack.c.l.b16 %v384
  %v421 = vunpack.c.l.b16 %v385
  %v422 = vunpack.c.l.b16 %v386
  %v423 = vunpack.c.l.b16 %v387
  %v424 = vpack.c.b16 %v409, %v408
  %v425 = vpack.c.b16 %v411, %v410
  %v426 = vpack.c.b16 %v413, %v412
  %v427 = vpack.c.b16 %v415, %v414
  %v428 = vpack.c.b16 %v417, %v416
  %v429 = vpack.c.b16 %v419, %v418
  %v430 = vpack.c.b16 %v421, %v420
  %v431 = vpack.c.b16 %v423, %v422
  %440 = vmatpush.bf16.msra.mxu0 %v431
  %441 = vmatpush.bf16.msra.mxu0 %v430
  %442 = vmatpush.bf16.msra.mxu0 %v429
  %443 = vmatpush.bf16.msra.mxu0 %v428
  %444 = vmatpush.bf16.msra.mxu0 %v427
  %445 = vmatpush.bf16.msra.mxu0 %v426
  %446 = vmatpush.bf16.msra.mxu0 %v425
  %447 = vmatpush.bf16.msra.mxu0 %v424
  %448 = vmatmul.bf16.gmra.mxu0 %v364
  %v449 = vpop.f32.mrf.mxu0
  %v450 = vadd.f32 %v390, %v449
  %v451 = vpop.f32.mrf.mxu0
  %v452 = vadd.f32 %v390, %v451
  %453 = vmatmul.bf16.gmra.mxu0 %v365
  %v454 = vpop.f32.mrf.mxu0
  %v455 = vadd.f32 %v390, %v454
  %v456 = vpop.f32.mrf.mxu0
  %v457 = vadd.f32 %v390, %v456
  %458 = vmatmul.bf16.gmra.mxu0 %v366
  %v459 = vpop.f32.mrf.mxu0
  %v460 = vadd.f32 %v390, %v459
  %v461 = vpop.f32.mrf.mxu0
  %v462 = vadd.f32 %v390, %v461
  %463 = vmatmul.bf16.gmra.mxu0 %v367
  %v464 = vpop.f32.mrf.mxu0
  %v465 = vadd.f32 %v390, %v464
  %v466 = vpop.f32.mrf.mxu0
  %v467 = vadd.f32 %v390, %v466
  %468 = vmatmul.bf16.gmra.mxu0 %v368
  %v469 = vpop.f32.mrf.mxu0
  %v470 = vadd.f32 %v390, %v469
  %v471 = vpop.f32.mrf.mxu0
  %v472 = vadd.f32 %v390, %v471
  %473 = vmatmul.bf16.gmra.mxu0 %v369
  %v474 = vpop.f32.mrf.mxu0
  %v475 = vadd.f32 %v390, %v474
  %v476 = vpop.f32.mrf.mxu0
  %v477 = vadd.f32 %v390, %v476
  %478 = vmatmul.bf16.gmra.mxu0 %v370
  %v479 = vpop.f32.mrf.mxu0
  %v480 = vadd.f32 %v390, %v479
  %v481 = vpop.f32.mrf.mxu0
  %v482 = vadd.f32 %v390, %v481
  %483 = vmatmul.bf16.gmra.mxu0 %v371
  %v484 = vpop.f32.mrf.mxu0
  %v485 = vadd.f32 %v390, %v484
  %v486 = vpop.f32.mrf.mxu0
  %v487 = vadd.f32 %v390, %v486
  %488 = vdwg.mxu0
  %489 = vst [vmem:[%s7] sm:$0xff] %v450
  %490 = vst [vmem:[%s7 + $0x8] sm:$0xff] %v452
  %491 = vst [vmem:[%s7 + $0x10] sm:$0xff] %v455
  %492 = vst [vmem:[%s7 + $0x18] sm:$0xff] %v457
  %493 = vst [vmem:[%s7 + $0x20] sm:$0xff] %v460
  %494 = vst [vmem:[%s7 + $0x28] sm:$0xff] %v462
  %495 = vst [vmem:[%s7 + $0x30] sm:$0xff] %v465
  %496 = vst [vmem:[%s7 + $0x38] sm:$0xff] %v467
  %497 = vst [vmem:[%s7 + $0x40] sm:$0xff] %v470
  %498 = vst [vmem:[%s7 + $0x48] sm:$0xff] %v472
  %499 = vst [vmem:[%s7 + $0x50] sm:$0xff] %v475
  %500 = vst [vmem:[%s7 + $0x58] sm:$0xff] %v477
  %501 = vst [vmem:[%s7 + $0x60] sm:$0xff] %v480
  %502 = vst [vmem:[%s7 + $0x68] sm:$0xff] %v482
  %503 = vst [vmem:[%s7 + $0x70] sm:$0xff] %v485
  %504 = vst [vmem:[%s7 + $0x78] sm:$0xff] %v487
  // Predicated region
  $region30: #{multi_layer_policy.1} parent=0 // pred_check
    _
  $region31: #{multi_layer_policy.1} parent=0 // pred_check_branch
    %506 = sbr.rel (0) target = $region33
  $region32: #{multi_layer_policy.1} parent=0 // pred_region
    _
  $region33: #{multi_layer_policy.1} parent=0 // pred_fallthru
    _
  // Predicated region
  $region34: #{multi_layer_policy.1} parent=0 // pred_check
    _
  $region35: #{multi_layer_policy.1} parent=0 // pred_check_branch
    %508 = sbr.rel (0) target = $region37
  $region36: #{multi_layer_policy.1} parent=0 // pred_region
    _
  $region37: #{multi_layer_policy.1} parent=0 // pred_fallthru
    _

</llo_original>
